<compile_context>
chip_gen: v5e
topology: v5e:2x2
jax: 0.10.0
libtpu: 0.0.40
codegen_flags: <defaults>
</compile_context>

<pallas_src>
import functools

import jax
import jax.numpy as jnp
import numpy as np
from jax.experimental import pallas as pl
from jax.experimental.pallas import tpu as pltpu


def _round_up(v, m):
    return (v + m - 1) // m * m


def _self_attention_kernel(x_ref, wqkv_ref, wo_t_ref, bo_ref, gamma_ref,
                           beta_ref, o_ref, *, batch, seq_len, num_heads,
                           head_dim, head_dim_pad):
    n, c_pad = x_ref.shape          # (B*S, C_pad) — lane-dense flat slab
    eps = 1e-5

    xf = x_ref[...].astype(jnp.float32)                     # (n, C_pad)

    # --- BatchNorm1d, training mode (biased stats over batch*seq per channel).
    # Two-pass mean/variance (avoids E[x^2]-E[x]^2 catastrophic cancellation).
    inv_n = 1.0 / n
    mean = jnp.sum(xf, axis=0, keepdims=True) * inv_n       # (1, C_pad)
    xc = xf - mean
    var = jnp.sum(xc * xc, axis=0, keepdims=True) * inv_n   # (1, C_pad)
    xn = xc * jax.lax.rsqrt(var + eps) * gamma_ref[...] + beta_ref[...]

    # --- Fused Q/K/V projection: one (n, C_pad) @ (C_pad, 3*C_pad) MXU op.
    qkv = jnp.dot(xn, wqkv_ref[...], preferred_element_type=jnp.float32)

    scale = 1.0 / (head_dim ** 0.5)          # scale uses the REAL head dim
    B, S, H, D = batch, seq_len, num_heads, head_dim_pad

    head_outs = []
    for h in range(H):                       # tiny static unroll over heads
        lo = h * D                           # 128-lane-aligned static slices
        qh = qkv[:, 0 * c_pad + lo:0 * c_pad + lo + D].reshape(B, S, D)
        kh = qkv[:, 1 * c_pad + lo:1 * c_pad + lo + D].reshape(B, S, D)
        vh = qkv[:, 2 * c_pad + lo:2 * c_pad + lo + D].reshape(B, S, D)

        e = jnp.einsum('bqd,bkd->bqk', qh, kh,
                       preferred_element_type=jnp.float32) * scale  # (B,S,S)
        e = e - jnp.max(e, axis=-1, keepdims=True)
        p = jnp.exp(e)
        denom = jnp.sum(p, axis=-1, keepdims=True)
        p = p * pl.reciprocal(denom, approx=False)           # EUP slot, exact
        oh = jnp.einsum('bqk,bkd->bqd', p, vh,
                        preferred_element_type=jnp.float32)  # (B,S,D)
        head_outs.append(oh.reshape(n, D))

    # Lane-aligned concat of full-128-lane head blocks -> (n, C_pad).
    heads = jnp.concatenate(head_outs, axis=-1)

    # --- Single fused output projection + bias + residual; one unmasked,
    # lane-dense full-block store.
    proj = jnp.dot(heads, wo_t_ref[...], preferred_element_type=jnp.float32)
    o_ref[...] = (proj + bo_ref[...] + xf).astype(o_ref.dtype)


@functools.partial(jax.jit, static_argnames=("num_heads",))
def self_attention_forward(x, params, *, num_heads):
    B, S, C = x.shape
    wq, wk, wv, wo, bo, gamma, beta = params

    H = num_heads
    hd = C // H
    hd_pad = max(_round_up(hd, 128), 128)    # pad each head dim to lane width
    c_pad = H * hd_pad
    n = B * S

    # --- Host/trace-time weight prep: transpose, head-wise pad, fuse QKV.
    def pad_proj_wt(w):
        # nn.Linear weight (C_out, C_in), used as xn @ w.T.  Output channels
        # are head-major (H, hd); pad per head to hd_pad, pad input rows to
        # c_pad with zeros.
        wt = w.T.reshape(C, H, hd)
        wt = jnp.pad(wt, ((0, c_pad - C), (0, 0), (0, hd_pad - hd)))
        return wt.reshape(c_pad, c_pad)

    wqkv = jnp.concatenate(
        [pad_proj_wt(wq), pad_proj_wt(wk), pad_proj_wt(wv)], axis=1)   # (C_pad, 3C_pad)
    wo_t = jnp.pad(wo.T.reshape(H, hd, C),
                   ((0, 0), (0, hd_pad - hd), (0, c_pad - C))).reshape(c_pad, c_pad)
    bo_p = jnp.pad(bo, (0, c_pad - C)).reshape(1, c_pad)
    gamma_p = jnp.pad(gamma, (0, c_pad - C)).reshape(1, c_pad)
    beta_p = jnp.pad(beta, (0, c_pad - C)).reshape(1, c_pad)
    # Lane-dense flat input slab (padded channels are zero).
    x_flat = jnp.pad(x, ((0, 0), (0, 0), (0, c_pad - C))).reshape(n, c_pad)

    kernel = functools.partial(_self_attention_kernel, batch=B, seq_len=S,
                               num_heads=H, head_dim=hd, head_dim_pad=hd_pad)
    out_flat = pl.pallas_call(
        kernel,
        out_shape=jax.ShapeDtypeStruct((n, c_pad), jnp.float32),
        grid=(1,),
        in_specs=[
            pl.BlockSpec((n, c_pad), lambda i: (0, 0)),           # x (flat)
            pl.BlockSpec((c_pad, 3 * c_pad), lambda i: (0, 0)),   # [Wq^T|Wk^T|Wv^T]
            pl.BlockSpec((c_pad, c_pad), lambda i: (0, 0)),       # Wout^T
            pl.BlockSpec((1, c_pad), lambda i: (0, 0)),           # b_out
            pl.BlockSpec((1, c_pad), lambda i: (0, 0)),           # BN gamma
            pl.BlockSpec((1, c_pad), lambda i: (0, 0)),           # BN beta
        ],
        out_specs=pl.BlockSpec((n, c_pad), lambda i: (0, 0)),
        compiler_params=pltpu.CompilerParams(
            dimension_semantics=("arbitrary",)),
    )(x_flat, wqkv, wo_t, bo_p, gamma_p, beta_p)

    # Wrapper-side layout plumbing: drop channel padding, restore (B, S, C).
    return out_flat[:, :C].reshape(B, S, C)


def self_attention_reference(x, params, *, num_heads):
    """Pure-JAX reference mirroring the PyTorch forward (training-mode BN).

    Uses HIGHEST matmul precision so the f32 reference matches the kernel's
    full-f32 MXU accumulation (XLA's DEFAULT f32 dot on TPU is bf16-pass).
    """
    B, S, C = x.shape
    hd = C // num_heads
    wq, wk, wv, wo, bo, gamma, beta = params
    hp = jax.lax.Precision.HIGHEST
    mean = jnp.mean(x, axis=(0, 1), keepdims=True)
    var = jnp.mean((x - mean) ** 2, axis=(0, 1), keepdims=True)
    xn = (x - mean) / jnp.sqrt(var + 1e-5) * gamma + beta
    q = jnp.einsum('bsc,dc->bsd', xn, wq, precision=hp).reshape(B, S, num_heads, hd)
    k = jnp.einsum('bsc,dc->bsd', xn, wk, precision=hp).reshape(B, S, num_heads, hd)
    v = jnp.einsum('bsc,dc->bsd', xn, wv, precision=hp).reshape(B, S, num_heads, hd)
    energy = jnp.einsum('nqhc,nkhc->nhqk', q, k, precision=hp)
    attn = jax.nn.softmax(energy / (hd ** 0.5), axis=-1)
    out = jnp.einsum('nhql,nlhc->nqhc', attn, v, precision=hp).reshape(B, S, C)
    out = jnp.einsum('bsc,dc->bsd', out, wo, precision=hp) + bo
    return out + x


if __name__ == "__main__":
    # Shapes consistent with the module: (batch, seq_len, C), num_heads | C.
    B, S, C = 2, 8, 32
    NUM_HEADS = 2

    key = jax.random.PRNGKey(0)
    kx, kq, kk, kv, ko, kb = jax.random.split(key, 6)
    x = jax.random.normal(kx, (B, S, C), dtype=jnp.float32)

    lim = 1.0 / np.sqrt(C)
    wq = jax.random.uniform(kq, (C, C), jnp.float32, -lim, lim)
    wk = jax.random.uniform(kk, (C, C), jnp.float32, -lim, lim)
    wv = jax.random.uniform(kv, (C, C), jnp.float32, -lim, lim)
    wo = jax.random.uniform(ko, (C, C), jnp.float32, -lim, lim)
    bo = jax.random.uniform(kb, (C,), jnp.float32, -lim, lim)
    gamma = jnp.ones((C,), jnp.float32)   # BatchNorm1d default affine params
    beta = jnp.zeros((C,), jnp.float32)
    params = (wq, wk, wv, wo, bo, gamma, beta)

    out = self_attention_forward(x, params, num_heads=NUM_HEADS)
    out = jax.block_until_ready(out)

    ref = jax.block_until_ready(
        self_attention_reference(x, params, num_heads=NUM_HEADS))
    # 1e-4 tolerance: covers MXU f32-multipass vs XLA-HIGHEST accumulation
    # order; still far below any real padding/BN/attention bug (O(0.1..1)).
    np.testing.assert_allclose(np.asarray(out), np.asarray(ref),
                               rtol=1e-4, atol=1e-4)
    print("KERNEL_OK")
</pallas_src>

<mosaic_0001>
module attributes {stable_mosaic.version = 11 : i64} {
  func.func @_self_attention_kernel(%arg0: i32, %arg1: memref<16x256xf32, #tpu.memory_space<vmem>>, %arg2: memref<256x768xf32, #tpu.memory_space<vmem>>, %arg3: memref<256x256xf32, #tpu.memory_space<vmem>>, %arg4: memref<1x256xf32, #tpu.memory_space<vmem>>, %arg5: memref<1x256xf32, #tpu.memory_space<vmem>>, %arg6: memref<1x256xf32, #tpu.memory_space<vmem>>, %arg7: memref<16x256xf32, #tpu.memory_space<vmem>>) attributes {dimension_semantics = [#tpu.dimension_semantics<arbitrary>], iteration_bounds = array<i64: 1>, scalar_prefetch = 0 : i64, scratch_operands = 0 : i64, tpu.core_type = #tpu.core_type<tc>, window_params = [{pipeline_mode = #tpu.pipeline_mode<synchronous>, transform_indices = @transform_0, window_bounds = array<i64: 16, 256>}, {pipeline_mode = #tpu.pipeline_mode<synchronous>, transform_indices = @transform_1, window_bounds = array<i64: 256, 768>}, {pipeline_mode = #tpu.pipeline_mode<synchronous>, transform_indices = @transform_2, window_bounds = array<i64: 256, 256>}, {pipeline_mode = #tpu.pipeline_mode<synchronous>, transform_indices = @transform_3, window_bounds = array<i64: 1, 256>}, {pipeline_mode = #tpu.pipeline_mode<synchronous>, transform_indices = @transform_4, window_bounds = array<i64: 1, 256>}, {pipeline_mode = #tpu.pipeline_mode<synchronous>, transform_indices = @transform_5, window_bounds = array<i64: 1, 256>}, {pipeline_mode = #tpu.pipeline_mode<synchronous>, transform_indices = @transform_6, window_bounds = array<i64: 16, 256>}]} {
    %c0 = arith.constant 0 : index
    %c0_0 = arith.constant 0 : index
    %0 = vector.load %arg1[%c0, %c0_0] : memref<16x256xf32, #tpu.memory_space<vmem>>, vector<16x256xf32>
    %cst = arith.constant dense<0.000000e+00> : vector<256xf32>
    %1 = vector.multi_reduction <add>, %0, %cst [0] : vector<16x256xf32> to vector<256xf32>
    %2 = vector.shape_cast %1 : vector<256xf32> to vector<1x256xf32>
    %cst_1 = arith.constant 6.250000e-02 : f32
    %3 = vector.broadcast %cst_1 : f32 to vector<1x256xf32>
    %4 = arith.mulf %2, %3 : vector<1x256xf32>
    %5 = vector.broadcast %4 : vector<1x256xf32> to vector<16x256xf32>
    %6 = arith.subf %0, %5 : vector<16x256xf32>
    %7 = arith.mulf %6, %6 : vector<16x256xf32>
    %cst_2 = arith.constant dense<0.000000e+00> : vector<256xf32>
    %8 = vector.multi_reduction <add>, %7, %cst_2 [0] : vector<16x256xf32> to vector<256xf32>
    %9 = vector.shape_cast %8 : vector<256xf32> to vector<1x256xf32>
    %cst_3 = arith.constant 6.250000e-02 : f32
    %10 = vector.broadcast %cst_3 : f32 to vector<1x256xf32>
    %11 = arith.mulf %9, %10 : vector<1x256xf32>
    %cst_4 = arith.constant 9.99999974E-6 : f32
    %12 = vector.broadcast %cst_4 : f32 to vector<1x256xf32>
    %13 = arith.addf %11, %12 : vector<1x256xf32>
    %14 = math.rsqrt %13 : vector<1x256xf32>
    %15 = vector.broadcast %14 : vector<1x256xf32> to vector<16x256xf32>
    %16 = arith.mulf %6, %15 : vector<16x256xf32>
    %c0_5 = arith.constant 0 : index
    %c0_6 = arith.constant 0 : index
    %17 = vector.load %arg5[%c0_5, %c0_6] : memref<1x256xf32, #tpu.memory_space<vmem>>, vector<1x256xf32>
    %18 = vector.broadcast %17 : vector<1x256xf32> to vector<16x256xf32>
    %19 = arith.mulf %16, %18 : vector<16x256xf32>
    %c0_7 = arith.constant 0 : index
    %c0_8 = arith.constant 0 : index
    %20 = vector.load %arg6[%c0_7, %c0_8] : memref<1x256xf32, #tpu.memory_space<vmem>>, vector<1x256xf32>
    %21 = vector.broadcast %20 : vector<1x256xf32> to vector<16x256xf32>
    %22 = arith.addf %19, %21 : vector<16x256xf32>
    %c0_9 = arith.constant 0 : index
    %c0_10 = arith.constant 0 : index
    %23 = vector.load %arg2[%c0_9, %c0_10] : memref<256x768xf32, #tpu.memory_space<vmem>>, vector<256x768xf32>
    %cst_11 = arith.constant dense<0.000000e+00> : vector<16x768xf32>
    %24 = tpu.matmul %22, %23, %cst_11 {dimension_numbers = #tpu.dot_dimension_numbers<[1], [0], [0], [1], [0, 0, 1, 1], [], []>} : vector<16x256xf32>, vector<256x768xf32>, vector<16x768xf32> -> vector<16x768xf32>
    %25 = vector.extract_strided_slice %24 {offsets = [0, 0], sizes = [16, 128], strides = [1, 1]} : vector<16x768xf32> to vector<16x128xf32>
    %26 = vector.shape_cast %25 : vector<16x128xf32> to vector<2x8x128xf32>
    %27 = vector.extract_strided_slice %24 {offsets = [0, 256], sizes = [16, 128], strides = [1, 1]} : vector<16x768xf32> to vector<16x128xf32>
    %28 = vector.shape_cast %27 : vector<16x128xf32> to vector<2x8x128xf32>
    %29 = vector.extract_strided_slice %24 {offsets = [0, 512], sizes = [16, 128], strides = [1, 1]} : vector<16x768xf32> to vector<16x128xf32>
    %30 = vector.shape_cast %29 : vector<16x128xf32> to vector<2x8x128xf32>
    "tpu.trace_start"() <{level = 10 : i32, message = "bqd,bkd->bqk"}> : () -> ()
    %cst_12 = arith.constant dense<0.000000e+00> : vector<2x8x8xf32>
    %31 = tpu.matmul %26, %28, %cst_12 {dimension_numbers = #tpu.dot_dimension_numbers<[2], [2], [1], [1], [0, 0, 0, 1, 1, 1], [0], [0]>} : vector<2x8x128xf32>, vector<2x8x128xf32>, vector<2x8x8xf32> -> vector<2x8x8xf32>
    "tpu.trace_stop"() : () -> ()
    %cst_13 = arith.constant 2.500000e-01 : f32
    %32 = vector.broadcast %cst_13 : f32 to vector<2x8x8xf32>
    %33 = arith.mulf %31, %32 : vector<2x8x8xf32>
    %cst_14 = arith.constant dense<0xFF800000> : vector<2x8xf32>
    %34 = vector.multi_reduction <maximumf>, %33, %cst_14 [2] : vector<2x8x8xf32> to vector<2x8xf32>
    %35 = vector.shape_cast %34 : vector<2x8xf32> to vector<2x8x1xf32>
    %36 = vector.broadcast %35 : vector<2x8x1xf32> to vector<2x8x8xf32>
    %37 = arith.subf %33, %36 : vector<2x8x8xf32>
    %38 = math.exp %37 : vector<2x8x8xf32>
    %cst_15 = arith.constant dense<0.000000e+00> : vector<2x8xf32>
    %39 = vector.multi_reduction <add>, %38, %cst_15 [2] : vector<2x8x8xf32> to vector<2x8xf32>
    %40 = vector.shape_cast %39 : vector<2x8xf32> to vector<2x8x1xf32>
    %41 = tpu.reciprocal %40 : vector<2x8x1xf32> -> vector<2x8x1xf32>
    %42 = vector.broadcast %41 : vector<2x8x1xf32> to vector<2x8x8xf32>
    %43 = arith.mulf %38, %42 : vector<2x8x8xf32>
    "tpu.trace_start"() <{level = 10 : i32, message = "bqk,bkd->bqd"}> : () -> ()
    %cst_16 = arith.constant dense<0.000000e+00> : vector<2x8x128xf32>
    %44 = tpu.matmul %43, %30, %cst_16 {dimension_numbers = #tpu.dot_dimension_numbers<[2], [1], [1], [2], [0, 0, 0, 1, 1, 2], [0], [0]>} : vector<2x8x8xf32>, vector<2x8x128xf32>, vector<2x8x128xf32> -> vector<2x8x128xf32>
    "tpu.trace_stop"() : () -> ()
    %45 = vector.shape_cast %44 : vector<2x8x128xf32> to vector<16x128xf32>
    %46 = vector.extract_strided_slice %24 {offsets = [0, 128], sizes = [16, 128], strides = [1, 1]} : vector<16x768xf32> to vector<16x128xf32>
    %47 = vector.shape_cast %46 : vector<16x128xf32> to vector<2x8x128xf32>
    %48 = vector.extract_strided_slice %24 {offsets = [0, 384], sizes = [16, 128], strides = [1, 1]} : vector<16x768xf32> to vector<16x128xf32>
    %49 = vector.shape_cast %48 : vector<16x128xf32> to vector<2x8x128xf32>
    %50 = vector.extract_strided_slice %24 {offsets = [0, 640], sizes = [16, 128], strides = [1, 1]} : vector<16x768xf32> to vector<16x128xf32>
    %51 = vector.shape_cast %50 : vector<16x128xf32> to vector<2x8x128xf32>
    "tpu.trace_start"() <{level = 10 : i32, message = "bqd,bkd->bqk"}> : () -> ()
    %cst_17 = arith.constant dense<0.000000e+00> : vector<2x8x8xf32>
    %52 = tpu.matmul %47, %49, %cst_17 {dimension_numbers = #tpu.dot_dimension_numbers<[2], [2], [1], [1], [0, 0, 0, 1, 1, 1], [0], [0]>} : vector<2x8x128xf32>, vector<2x8x128xf32>, vector<2x8x8xf32> -> vector<2x8x8xf32>
    "tpu.trace_stop"() : () -> ()
    %cst_18 = arith.constant 2.500000e-01 : f32
    %53 = vector.broadcast %cst_18 : f32 to vector<2x8x8xf32>
    %54 = arith.mulf %52, %53 : vector<2x8x8xf32>
    %cst_19 = arith.constant dense<0xFF800000> : vector<2x8xf32>
    %55 = vector.multi_reduction <maximumf>, %54, %cst_19 [2] : vector<2x8x8xf32> to vector<2x8xf32>
    %56 = vector.shape_cast %55 : vector<2x8xf32> to vector<2x8x1xf32>
    %57 = vector.broadcast %56 : vector<2x8x1xf32> to vector<2x8x8xf32>
    %58 = arith.subf %54, %57 : vector<2x8x8xf32>
    %59 = math.exp %58 : vector<2x8x8xf32>
    %cst_20 = arith.constant dense<0.000000e+00> : vector<2x8xf32>
    %60 = vector.multi_reduction <add>, %59, %cst_20 [2] : vector<2x8x8xf32> to vector<2x8xf32>
    %61 = vector.shape_cast %60 : vector<2x8xf32> to vector<2x8x1xf32>
    %62 = tpu.reciprocal %61 : vector<2x8x1xf32> -> vector<2x8x1xf32>
    %63 = vector.broadcast %62 : vector<2x8x1xf32> to vector<2x8x8xf32>
    %64 = arith.mulf %59, %63 : vector<2x8x8xf32>
    "tpu.trace_start"() <{level = 10 : i32, message = "bqk,bkd->bqd"}> : () -> ()
    %cst_21 = arith.constant dense<0.000000e+00> : vector<2x8x128xf32>
    %65 = tpu.matmul %64, %51, %cst_21 {dimension_numbers = #tpu.dot_dimension_numbers<[2], [1], [1], [2], [0, 0, 0, 1, 1, 2], [0], [0]>} : vector<2x8x8xf32>, vector<2x8x128xf32>, vector<2x8x128xf32> -> vector<2x8x128xf32>
    "tpu.trace_stop"() : () -> ()
    %66 = vector.shape_cast %65 : vector<2x8x128xf32> to vector<16x128xf32>
    %67 = tpu.concatenate %45, %66 in 1 : vector<16x128xf32>, vector<16x128xf32> -> vector<16x256xf32>
    %c0_22 = arith.constant 0 : index
    %c0_23 = arith.constant 0 : index
    %68 = vector.load %arg3[%c0_22, %c0_23] : memref<256x256xf32, #tpu.memory_space<vmem>>, vector<256x256xf32>
    %cst_24 = arith.constant dense<0.000000e+00> : vector<16x256xf32>
    %69 = tpu.matmul %67, %68, %cst_24 {dimension_numbers = #tpu.dot_dimension_numbers<[1], [0], [0], [1], [0, 0, 1, 1], [], []>} : vector<16x256xf32>, vector<256x256xf32>, vector<16x256xf32> -> vector<16x256xf32>
    %c0_25 = arith.constant 0 : index
    %c0_26 = arith.constant 0 : index
    %70 = vector.load %arg4[%c0_25, %c0_26] : memref<1x256xf32, #tpu.memory_space<vmem>>, vector<1x256xf32>
    %71 = vector.broadcast %70 : vector<1x256xf32> to vector<16x256xf32>
    %72 = arith.addf %69, %71 : vector<16x256xf32>
    %73 = arith.addf %72, %0 : vector<16x256xf32>
    %c0_27 = arith.constant 0 : index
    %c0_28 = arith.constant 0 : index
    %74 = vector.load %arg7[%c0_27, %c0_28] : memref<16x256xf32, #tpu.memory_space<vmem>>, vector<16x256xf32>
    tpu.vector_store %arg7[%c0_27, %c0_28], %73 {strides = array<i32>} : memref<16x256xf32, #tpu.memory_space<vmem>>, vector<16x256xf32>,
    return
  }
  func.func @transform_0(%arg0: i32) -> (i32, i32) {
    %c0_i32 = arith.constant 0 : i32
    %c0_i32_0 = arith.constant 0 : i32
    %c0_i32_1 = arith.constant 0 : i32
    return %c0_i32, %c0_i32_0 : i32, i32
  }
  func.func @transform_1(%arg0: i32) -> (i32, i32) {
    %c0_i32 = arith.constant 0 : i32
    %c0_i32_0 = arith.constant 0 : i32
    %c0_i32_1 = arith.constant 0 : i32
    return %c0_i32, %c0_i32_0 : i32, i32
  }
  func.func @transform_2(%arg0: i32) -> (i32, i32) {
    %c0_i32 = arith.constant 0 : i32
    %c0_i32_0 = arith.constant 0 : i32
    %c0_i32_1 = arith.constant 0 : i32
    return %c0_i32, %c0_i32_0 : i32, i32
  }
  func.func @transform_3(%arg0: i32) -> (i32, i32) {
    %c0_i32 = arith.constant 0 : i32
    %c0_i32_0 = arith.constant 0 : i32
    %c0_i32_1 = arith.constant 0 : i32
    return %c0_i32, %c0_i32_0 : i32, i32
  }
  func.func @transform_4(%arg0: i32) -> (i32, i32) {
    %c0_i32 = arith.constant 0 : i32
    %c0_i32_0 = arith.constant 0 : i32
    %c0_i32_1 = arith.constant 0 : i32
    return %c0_i32, %c0_i32_0 : i32, i32
  }
  func.func @transform_5(%arg0: i32) -> (i32, i32) {
    %c0_i32 = arith.constant 0 : i32
    %c0_i32_0 = arith.constant 0 : i32
    %c0_i32_1 = arith.constant 0 : i32
    return %c0_i32, %c0_i32_0 : i32, i32
  }
  func.func @transform_6(%arg0: i32) -> (i32, i32) {
    %c0_i32 = arith.constant 0 : i32
    %c0_i32_0 = arith.constant 0 : i32
    %c0_i32_1 = arith.constant 0 : i32
    return %c0_i32, %c0_i32_0 : i32, i32
  }
}

</mosaic_0001>

<llo_original>
// kernel: self_attention_forward.1
$region0: #{self_attention_forward.1}
  #allocation0 [shape = 'u32[]', space=smem, size = 0x4, offset = 0x4, fixed_abs, tag = 'smem constant byte address 0x4 - core index']
  #allocation1 [shape = 'u32[72,128]{1,0:T(1,128)}', space=vmem, size = 0x9000, scoped, tag = 'internal scratch']
  %s0 = inlined_call_operand.vmem [shape: f32[16,256], index: 0, kind: input, shape index: {}]
  %s1 = inlined_call_operand.vmem [shape: f32[256,768], index: 1, kind: input, shape index: {}]
  %s2 = inlined_call_operand.vmem [shape: f32[256,256], index: 2, kind: input, shape index: {}]
  %s3 = inlined_call_operand.vmem [shape: f32[1,256], index: 3, kind: input, shape index: {}]
  %s4 = inlined_call_operand.vmem [shape: f32[1,256], index: 4, kind: input, shape index: {}]
  %s5 = inlined_call_operand.vmem [shape: f32[1,256], index: 5, kind: input, shape index: {}]
  %s6 = inlined_call_operand.vmem [shape: f32[16,256], index: 6, kind: output, shape index: {}]
  %s7 = sld [smem:[#allocation0]]
  $region34: #{self_attention_forward.1} parent=0
    _
  %s9 = ssub.s32 1, %s7
  %s10 = scalar_select 0, %s9, %s7
  // Predicated region
  $region2: #{self_attention_forward.1} parent=0 // pred_check
    _
  $region3: #{self_attention_forward.1} parent=0 // pred_check_branch
    %12 = sbr.rel (0) target = $region5
  $region4: #{self_attention_forward.1} parent=0 // pred_region
    _
  $region5: #{self_attention_forward.1} parent=0 // pred_fallthru
    _
  // Predicated region
  $region6: #{self_attention_forward.1} parent=0 // pred_check
    _
  $region7: #{self_attention_forward.1} parent=0 // pred_check_branch
    %14 = sbr.rel (0) target = $region9
  $region8: #{self_attention_forward.1} parent=0 // pred_region
    _
  $region9: #{self_attention_forward.1} parent=0 // pred_fallthru
    _
  // Predicated region
  $region10: #{self_attention_forward.1} parent=0 // pred_check
    _
  $region11: #{self_attention_forward.1} parent=0 // pred_check_branch
    %16 = sbr.rel (0) target = $region13
  $region12: #{self_attention_forward.1} parent=0 // pred_region
    _
  $region13: #{self_attention_forward.1} parent=0 // pred_fallthru
    _
  // Predicated region
  $region14: #{self_attention_forward.1} parent=0 // pred_check
    _
  $region15: #{self_attention_forward.1} parent=0 // pred_check_branch
    %18 = sbr.rel (0) target = $region17
  $region16: #{self_attention_forward.1} parent=0 // pred_region
    _
  $region17: #{self_attention_forward.1} parent=0 // pred_fallthru
    _
  // Predicated region
  $region18: #{self_attention_forward.1} parent=0 // pred_check
    _
  $region19: #{self_attention_forward.1} parent=0 // pred_check_branch
    %20 = sbr.rel (0) target = $region21
  $region20: #{self_attention_forward.1} parent=0 // pred_region
    _
  $region21: #{self_attention_forward.1} parent=0 // pred_fallthru
    _
  // Predicated region
  $region22: #{self_attention_forward.1} parent=0 // pred_check
    _
  $region23: #{self_attention_forward.1} parent=0 // pred_check_branch
    %22 = sbr.rel (0) target = $region25
  $region24: #{self_attention_forward.1} parent=0 // pred_region
    _
  $region25: #{self_attention_forward.1} parent=0 // pred_fallthru
    _
  %v23 = vld [vmem:[%s0] sm:$0xff]
  %v24 = vld [vmem:[%s0 + $0x8] sm:$0xff]
  %v25 = vld [vmem:[%s0 + $0x10] sm:$0xff]
  %v26 = vld [vmem:[%s0 + $0x18] sm:$0xff]
  %v27 = vadd.f32 %v23, %v25
  %v28 = vrot.slane %v27, 4
  %v29 = vadd.f32 %v27, %v28
  %v30 = vrot.slane %v29, 2
  %v31 = vadd.f32 %v29, %v30
  %v32 = vrot.slane %v31, 1
  %v33 = vadd.f32 %v31, %v32
  %v34 = vadd.f32 %v24, %v26
  %v35 = vrot.slane %v34, 4
  %v36 = vadd.f32 %v34, %v35
  %v37 = vrot.slane %v36, 2
  %v38 = vadd.f32 %v36, %v37
  %v39 = vrot.slane %v38, 1
  %v40 = vadd.f32 %v38, %v39
  %v41 = vmul.f32 %v33, 0.0625
  %v42 = vmul.f32 %v40, 0.0625
  %v43 = vsub.f32 %v23, %v41
  %v44 = vsub.f32 %v24, %v42
  %v45 = vsub.f32 %v25, %v41
  %v46 = vsub.f32 %v26, %v42
  %v47 = vmul.f32 %v43, %v43
  %v48 = vmul.f32 %v44, %v44
  %v49 = vmul.f32 %v45, %v45
  %v50 = vmul.f32 %v46, %v46
  %v51 = vadd.f32 %v47, %v49
  %v52 = vrot.slane %v51, 4
  %v53 = vadd.f32 %v51, %v52
  %v54 = vrot.slane %v53, 2
  %v55 = vadd.f32 %v53, %v54
  %v56 = vrot.slane %v55, 1
  %v57 = vadd.f32 %v55, %v56
  %v58 = vadd.f32 %v48, %v50
  %v59 = vrot.slane %v58, 4
  %v60 = vadd.f32 %v58, %v59
  %v61 = vrot.slane %v60, 2
  %v62 = vadd.f32 %v60, %v61
  %v63 = vrot.slane %v62, 1
  %v64 = vadd.f32 %v62, %v63
  %v65 = vmul.f32 %v57, 0.0625
  %v66 = vmul.f32 %v64, 0.0625
  %v67 = vadd.f32 %v65, 1e-05
  %v68 = vadd.f32 %v66, 1e-05
  %v69 = vrsqrt.pop %v67
  %v70 = vmul.f32 %v69, %v67
  %v71 = vmul.f32 %v70, %v69
  %v72 = vmul.f32 0.5, %v71
  %v73 = vsub.f32 1.5, %v72
  %v74 = vmul.f32 %v69, %v73
  %vm75 = vweird.f32 %v67
  %vm76 = vweird.f32 %v69
  %vm77 = vmor %vm75, %vm76
  %v78 = vsel %vm77, %v69, %v74
  %v79 = vrsqrt.pop %v68
  %v80 = vmul.f32 %v79, %v68
  %v81 = vmul.f32 %v80, %v79
  %v82 = vmul.f32 0.5, %v81
  %v83 = vsub.f32 1.5, %v82
  %v84 = vmul.f32 %v79, %v83
  %vm85 = vweird.f32 %v68
  %vm86 = vweird.f32 %v79
  %vm87 = vmor %vm85, %vm86
  %v88 = vsel %vm87, %v79, %v84
  %v89 = vmul.f32 %v43, %v78
  %v90 = vmul.f32 %v44, %v88
  %v91 = vmul.f32 %v45, %v78
  %v92 = vmul.f32 %v46, %v88
  %v93 = vld [vmem:[%s4] sm:$0x3]
  %v95 = vperm.slane %v93, 0
  %v96 = vperm.slane %v93, 1
  %v99 = vmul.f32 %v89, %v95
  %v100 = vmul.f32 %v90, %v96
  %v101 = vmul.f32 %v91, %v95
  %v102 = vmul.f32 %v92, %v96
  %v103 = vld [vmem:[%s5] sm:$0x3]
  %v105 = vperm.slane %v103, 0
  %v106 = vperm.slane %v103, 1
  %v109 = vadd.f32 %v99, %v105
  %v110 = vadd.f32 %v100, %v106
  %v111 = vadd.f32 %v101, %v105
  %v112 = vadd.f32 %v102, %v106
  %v113 = vld [vmem:[%s1] sm:$0xff]
  %v114 = vld [vmem:[%s1 + $0x8] sm:$0xff]
  %v115 = vld [vmem:[%s1 + $0x10] sm:$0xff]
  %v116 = vld [vmem:[%s1 + $0x18] sm:$0xff]
  %v117 = vld [vmem:[%s1 + $0x20] sm:$0xff]
  %v118 = vld [vmem:[%s1 + $0x28] sm:$0xff]
  %v119 = vld [vmem:[%s1 + $0x30] sm:$0xff]
  %v120 = vld [vmem:[%s1 + $0x38] sm:$0xff]
  %v121 = vld [vmem:[%s1 + $0x40] sm:$0xff]
  %v122 = vld [vmem:[%s1 + $0x48] sm:$0xff]
  %v123 = vld [vmem:[%s1 + $0x50] sm:$0xff]
  %v124 = vld [vmem:[%s1 + $0x58] sm:$0xff]
  %v125 = vld [vmem:[%s1 + $0x60] sm:$0xff]
  %v126 = vld [vmem:[%s1 + $0x68] sm:$0xff]
  %v127 = vld [vmem:[%s1 + $0x70] sm:$0xff]
  %v128 = vld [vmem:[%s1 + $0x78] sm:$0xff]
  %v129 = vld [vmem:[%s1 + $0x80] sm:$0xff]
  %v130 = vld [vmem:[%s1 + $0x88] sm:$0xff]
  %v131 = vld [vmem:[%s1 + $0x90] sm:$0xff]
  %v132 = vld [vmem:[%s1 + $0x98] sm:$0xff]
  %v133 = vld [vmem:[%s1 + $0xa0] sm:$0xff]
  %v134 = vld [vmem:[%s1 + $0xa8] sm:$0xff]
  %v135 = vld [vmem:[%s1 + $0xb0] sm:$0xff]
  %v136 = vld [vmem:[%s1 + $0xb8] sm:$0xff]
  %v137 = vld [vmem:[%s1 + $0xc0] sm:$0xff]
  %v138 = vld [vmem:[%s1 + $0xc8] sm:$0xff]
  %v139 = vld [vmem:[%s1 + $0xd0] sm:$0xff]
  %v140 = vld [vmem:[%s1 + $0xd8] sm:$0xff]
  %v141 = vld [vmem:[%s1 + $0xe0] sm:$0xff]
  %v142 = vld [vmem:[%s1 + $0xe8] sm:$0xff]
  %v143 = vld [vmem:[%s1 + $0xf0] sm:$0xff]
  %v144 = vld [vmem:[%s1 + $0xf8] sm:$0xff]
  %v145 = vld [vmem:[%s1 + $0x100] sm:$0xff]
  %v146 = vld [vmem:[%s1 + $0x108] sm:$0xff]
  %v147 = vld [vmem:[%s1 + $0x110] sm:$0xff]
  %v148 = vld [vmem:[%s1 + $0x118] sm:$0xff]
  %v149 = vld [vmem:[%s1 + $0x120] sm:$0xff]
  %v150 = vld [vmem:[%s1 + $0x128] sm:$0xff]
  %v151 = vld [vmem:[%s1 + $0x130] sm:$0xff]
  %v152 = vld [vmem:[%s1 + $0x138] sm:$0xff]
  %v153 = vld [vmem:[%s1 + $0x140] sm:$0xff]
  %v154 = vld [vmem:[%s1 + $0x148] sm:$0xff]
  %v155 = vld [vmem:[%s1 + $0x150] sm:$0xff]
  %v156 = vld [vmem:[%s1 + $0x158] sm:$0xff]
  %v157 = vld [vmem:[%s1 + $0x160] sm:$0xff]
  %v158 = vld [vmem:[%s1 + $0x168] sm:$0xff]
  %v159 = vld [vmem:[%s1 + $0x170] sm:$0xff]
  %v160 = vld [vmem:[%s1 + $0x178] sm:$0xff]
  %v161 = vld [vmem:[%s1 + $0x180] sm:$0xff]
  %v162 = vld [vmem:[%s1 + $0x188] sm:$0xff]
  %v163 = vld [vmem:[%s1 + $0x190] sm:$0xff]
  %v164 = vld [vmem:[%s1 + $0x198] sm:$0xff]
  %v165 = vld [vmem:[%s1 + $0x1a0] sm:$0xff]
  %v166 = vld [vmem:[%s1 + $0x1a8] sm:$0xff]
  %v167 = vld [vmem:[%s1 + $0x1b0] sm:$0xff]
  %v168 = vld [vmem:[%s1 + $0x1b8] sm:$0xff]
  %v169 = vld [vmem:[%s1 + $0x1c0] sm:$0xff]
  %v170 = vld [vmem:[%s1 + $0x1c8] sm:$0xff]
  %v171 = vld [vmem:[%s1 + $0x1d0] sm:$0xff]
  %v172 = vld [vmem:[%s1 + $0x1d8] sm:$0xff]
  %v173 = vld [vmem:[%s1 + $0x1e0] sm:$0xff]
  %v174 = vld [vmem:[%s1 + $0x1e8] sm:$0xff]
  %v175 = vld [vmem:[%s1 + $0x1f0] sm:$0xff]
  %v176 = vld [vmem:[%s1 + $0x1f8] sm:$0xff]
  %v177 = vld [vmem:[%s1 + $0x200] sm:$0xff]
  %v178 = vld [vmem:[%s1 + $0x208] sm:$0xff]
  %v179 = vld [vmem:[%s1 + $0x210] sm:$0xff]
  %v180 = vld [vmem:[%s1 + $0x218] sm:$0xff]
  %v181 = vld [vmem:[%s1 + $0x220] sm:$0xff]
  %v182 = vld [vmem:[%s1 + $0x228] sm:$0xff]
  %v183 = vld [vmem:[%s1 + $0x230] sm:$0xff]
  %v184 = vld [vmem:[%s1 + $0x238] sm:$0xff]
  %v185 = vld [vmem:[%s1 + $0x240] sm:$0xff]
  %v186 = vld [vmem:[%s1 + $0x248] sm:$0xff]
  %v187 = vld [vmem:[%s1 + $0x250] sm:$0xff]
  %v188 = vld [vmem:[%s1 + $0x258] sm:$0xff]
  %v189 = vld [vmem:[%s1 + $0x260] sm:$0xff]
  %v190 = vld [vmem:[%s1 + $0x268] sm:$0xff]
  %v191 = vld [vmem:[%s1 + $0x270] sm:$0xff]
  %v192 = vld [vmem:[%s1 + $0x278] sm:$0xff]
  %v193 = vld [vmem:[%s1 + $0x280] sm:$0xff]
  %v194 = vld [vmem:[%s1 + $0x288] sm:$0xff]
  %v195 = vld [vmem:[%s1 + $0x290] sm:$0xff]
  %v196 = vld [vmem:[%s1 + $0x298] sm:$0xff]
  %v197 = vld [vmem:[%s1 + $0x2a0] sm:$0xff]
  %v198 = vld [vmem:[%s1 + $0x2a8] sm:$0xff]
  %v199 = vld [vmem:[%s1 + $0x2b0] sm:$0xff]
  %v200 = vld [vmem:[%s1 + $0x2b8] sm:$0xff]
  %v201 = vld [vmem:[%s1 + $0x2c0] sm:$0xff]
  %v202 = vld [vmem:[%s1 + $0x2c8] sm:$0xff]
  %v203 = vld [vmem:[%s1 + $0x2d0] sm:$0xff]
  %v204 = vld [vmem:[%s1 + $0x2d8] sm:$0xff]
  %v205 = vld [vmem:[%s1 + $0x2e0] sm:$0xff]
  %v206 = vld [vmem:[%s1 + $0x2e8] sm:$0xff]
  %v207 = vld [vmem:[%s1 + $0x2f0] sm:$0xff]
  %v208 = vld [vmem:[%s1 + $0x2f8] sm:$0xff]
  %v209 = vld [vmem:[%s1 + $0x300] sm:$0xff]
  %v210 = vld [vmem:[%s1 + $0x308] sm:$0xff]
  %v211 = vld [vmem:[%s1 + $0x310] sm:$0xff]
  %v212 = vld [vmem:[%s1 + $0x318] sm:$0xff]
  %v213 = vld [vmem:[%s1 + $0x320] sm:$0xff]
  %v214 = vld [vmem:[%s1 + $0x328] sm:$0xff]
  %v215 = vld [vmem:[%s1 + $0x330] sm:$0xff]
  %v216 = vld [vmem:[%s1 + $0x338] sm:$0xff]
  %v217 = vld [vmem:[%s1 + $0x340] sm:$0xff]
  %v218 = vld [vmem:[%s1 + $0x348] sm:$0xff]
  %v219 = vld [vmem:[%s1 + $0x350] sm:$0xff]
  %v220 = vld [vmem:[%s1 + $0x358] sm:$0xff]
  %v221 = vld [vmem:[%s1 + $0x360] sm:$0xff]
  %v222 = vld [vmem:[%s1 + $0x368] sm:$0xff]
  %v223 = vld [vmem:[%s1 + $0x370] sm:$0xff]
  %v224 = vld [vmem:[%s1 + $0x378] sm:$0xff]
  %v225 = vld [vmem:[%s1 + $0x380] sm:$0xff]
  %v226 = vld [vmem:[%s1 + $0x388] sm:$0xff]
  %v227 = vld [vmem:[%s1 + $0x390] sm:$0xff]
  %v228 = vld [vmem:[%s1 + $0x398] sm:$0xff]
  %v229 = vld [vmem:[%s1 + $0x3a0] sm:$0xff]
  %v230 = vld [vmem:[%s1 + $0x3a8] sm:$0xff]
  %v231 = vld [vmem:[%s1 + $0x3b0] sm:$0xff]
  %v232 = vld [vmem:[%s1 + $0x3b8] sm:$0xff]
  %v233 = vld [vmem:[%s1 + $0x3c0] sm:$0xff]
  %v234 = vld [vmem:[%s1 + $0x3c8] sm:$0xff]
  %v235 = vld [vmem:[%s1 + $0x3d0] sm:$0xff]
  %v236 = vld [vmem:[%s1 + $0x3d8] sm:$0xff]
  %v237 = vld [vmem:[%s1 + $0x3e0] sm:$0xff]
  %v238 = vld [vmem:[%s1 + $0x3e8] sm:$0xff]
  %v239 = vld [vmem:[%s1 + $0x3f0] sm:$0xff]
  %v240 = vld [vmem:[%s1 + $0x3f8] sm:$0xff]
  %v241 = vld [vmem:[%s1 + $0x400] sm:$0xff]
  %v242 = vld [vmem:[%s1 + $0x408] sm:$0xff]
  %v243 = vld [vmem:[%s1 + $0x410] sm:$0xff]
  %v244 = vld [vmem:[%s1 + $0x418] sm:$0xff]
  %v245 = vld [vmem:[%s1 + $0x420] sm:$0xff]
  %v246 = vld [vmem:[%s1 + $0x428] sm:$0xff]
  %v247 = vld [vmem:[%s1 + $0x430] sm:$0xff]
  %v248 = vld [vmem:[%s1 + $0x438] sm:$0xff]
  %v249 = vld [vmem:[%s1 + $0x440] sm:$0xff]
  %v250 = vld [vmem:[%s1 + $0x448] sm:$0xff]
  %v251 = vld [vmem:[%s1 + $0x450] sm:$0xff]
  %v252 = vld [vmem:[%s1 + $0x458] sm:$0xff]
  %v253 = vld [vmem:[%s1 + $0x460] sm:$0xff]
  %v254 = vld [vmem:[%s1 + $0x468] sm:$0xff]
  %v255 = vld [vmem:[%s1 + $0x470] sm:$0xff]
  %v256 = vld [vmem:[%s1 + $0x478] sm:$0xff]
  %v257 = vld [vmem:[%s1 + $0x480] sm:$0xff]
  %v258 = vld [vmem:[%s1 + $0x488] sm:$0xff]
  %v259 = vld [vmem:[%s1 + $0x490] sm:$0xff]
  %v260 = vld [vmem:[%s1 + $0x498] sm:$0xff]
  %v261 = vld [vmem:[%s1 + $0x4a0] sm:$0xff]
  %v262 = vld [vmem:[%s1 + $0x4a8] sm:$0xff]
  %v263 = vld [vmem:[%s1 + $0x4b0] sm:$0xff]
  %v264 = vld [vmem:[%s1 + $0x4b8] sm:$0xff]
  %v265 = vld [vmem:[%s1 + $0x4c0] sm:$0xff]
  %v266 = vld [vmem:[%s1 + $0x4c8] sm:$0xff]
  %v267 = vld [vmem:[%s1 + $0x4d0] sm:$0xff]
  %v268 = vld [vmem:[%s1 + $0x4d8] sm:$0xff]
  %v269 = vld [vmem:[%s1 + $0x4e0] sm:$0xff]
  %v270 = vld [vmem:[%s1 + $0x4e8] sm:$0xff]
  %v271 = vld [vmem:[%s1 + $0x4f0] sm:$0xff]
  %v272 = vld [vmem:[%s1 + $0x4f8] sm:$0xff]
  %v273 = vld [vmem:[%s1 + $0x500] sm:$0xff]
  %v274 = vld [vmem:[%s1 + $0x508] sm:$0xff]
  %v275 = vld [vmem:[%s1 + $0x510] sm:$0xff]
  %v276 = vld [vmem:[%s1 + $0x518] sm:$0xff]
  %v277 = vld [vmem:[%s1 + $0x520] sm:$0xff]
  %v278 = vld [vmem:[%s1 + $0x528] sm:$0xff]
  %v279 = vld [vmem:[%s1 + $0x530] sm:$0xff]
  %v280 = vld [vmem:[%s1 + $0x538] sm:$0xff]
  %v281 = vld [vmem:[%s1 + $0x540] sm:$0xff]
  %v282 = vld [vmem:[%s1 + $0x548] sm:$0xff]
  %v283 = vld [vmem:[%s1 + $0x550] sm:$0xff]
  %v284 = vld [vmem:[%s1 + $0x558] sm:$0xff]
  %v285 = vld [vmem:[%s1 + $0x560] sm:$0xff]
  %v286 = vld [vmem:[%s1 + $0x568] sm:$0xff]
  %v287 = vld [vmem:[%s1 + $0x570] sm:$0xff]
  %v288 = vld [vmem:[%s1 + $0x578] sm:$0xff]
  %v289 = vld [vmem:[%s1 + $0x580] sm:$0xff]
  %v290 = vld [vmem:[%s1 + $0x588] sm:$0xff]
  %v291 = vld [vmem:[%s1 + $0x590] sm:$0xff]
  %v292 = vld [vmem:[%s1 + $0x598] sm:$0xff]
  %v293 = vld [vmem:[%s1 + $0x5a0] sm:$0xff]
  %v294 = vld [vmem:[%s1 + $0x5a8] sm:$0xff]
  %v295 = vld [vmem:[%s1 + $0x5b0] sm:$0xff]
  %v296 = vld [vmem:[%s1 + $0x5b8] sm:$0xff]
  %v297 = vld [vmem:[%s1 + $0x5c0] sm:$0xff]
  %v298 = vld [vmem:[%s1 + $0x5c8] sm:$0xff]
  %v299 = vld [vmem:[%s1 + $0x5d0] sm:$0xff]
  %v300 = vld [vmem:[%s1 + $0x5d8] sm:$0xff]
  %v301 = vld [vmem:[%s1 + $0x5e0] sm:$0xff]
  %v302 = vld [vmem:[%s1 + $0x5e8] sm:$0xff]
  %v303 = vld [vmem:[%s1 + $0x5f0] sm:$0xff]
  %v304 = vld [vmem:[%s1 + $0x5f8] sm:$0xff]
  %305 = vmatpush.msra.mxu0 %v203
  %306 = vmatpush.msra.mxu0 %v197
  %307 = vmatpush.msra.mxu0 %v191
  %308 = vmatpush.msra.mxu0 %v185
  %309 = vmatpush.msra.mxu0 %v179
  %310 = vmatpush.msra.mxu0 %v173
  %311 = vmatpush.msra.mxu0 %v167
  %312 = vmatpush.msra.mxu0 %v161
  %313 = vmatpush.msra.mxu0 %v155
  %314 = vmatpush.msra.mxu0 %v149
  %315 = vmatpush.msra.mxu0 %v143
  %316 = vmatpush.msra.mxu0 %v137
  %317 = vmatpush.msra.mxu0 %v131
  %318 = vmatpush.msra.mxu0 %v125
  %319 = vmatpush.msra.mxu0 %v119
  %320 = vmatpush.msra.mxu0 %v113
  %321 = vmatmul.f32.gmra.mxu0 %v109
  %v322 = vpop.f32.mrf.mxu0
  %v323 = vadd.f32 0.0, %v322
  %324 = vmatmul.f32.gmra.mxu0 %v111
  %v325 = vpop.f32.mrf.mxu0
  %v326 = vadd.f32 0.0, %v325
  %327 = vdwg.mxu0
  %328 = vmatpush.msra.mxu0 %v299
  %329 = vmatpush.msra.mxu0 %v293
  %330 = vmatpush.msra.mxu0 %v287
  %331 = vmatpush.msra.mxu0 %v281
  %332 = vmatpush.msra.mxu0 %v275
  %333 = vmatpush.msra.mxu0 %v269
  %334 = vmatpush.msra.mxu0 %v263
  %335 = vmatpush.msra.mxu0 %v257
  %336 = vmatpush.msra.mxu0 %v251
  %337 = vmatpush.msra.mxu0 %v245
  %338 = vmatpush.msra.mxu0 %v239
  %339 = vmatpush.msra.mxu0 %v233
  %340 = vmatpush.msra.mxu0 %v227
  %341 = vmatpush.msra.mxu0 %v221
  %342 = vmatpush.msra.mxu0 %v215
  %343 = vmatpush.msra.mxu0 %v209
  %344 = vmatmul.f32.gmra.mxu0 %v110
  %v345 = vpop.f32.mrf.mxu0
  %v346 = vadd.f32 %v323, %v345
  %347 = vmatmul.f32.gmra.mxu0 %v112
  %v348 = vpop.f32.mrf.mxu0
  %v349 = vadd.f32 %v326, %v348
  %350 = vdwg.mxu0
  %351 = vmatpush.msra.mxu0 %v204
  %352 = vmatpush.msra.mxu0 %v198
  %353 = vmatpush.msra.mxu0 %v192
  %354 = vmatpush.msra.mxu0 %v186
  %355 = vmatpush.msra.mxu0 %v180
  %356 = vmatpush.msra.mxu0 %v174
  %357 = vmatpush.msra.mxu0 %v168
  %358 = vmatpush.msra.mxu0 %v162
  %359 = vmatpush.msra.mxu0 %v156
  %360 = vmatpush.msra.mxu0 %v150
  %361 = vmatpush.msra.mxu0 %v144
  %362 = vmatpush.msra.mxu0 %v138
  %363 = vmatpush.msra.mxu0 %v132
  %364 = vmatpush.msra.mxu0 %v126
  %365 = vmatpush.msra.mxu0 %v120
  %366 = vmatpush.msra.mxu0 %v114
  %367 = vmatmul.f32.gmra.mxu0 %v109
  %v368 = vpop.f32.mrf.mxu0
  %v369 = vadd.f32 0.0, %v368
  %370 = vmatmul.f32.gmra.mxu0 %v111
  %v371 = vpop.f32.mrf.mxu0
  %v372 = vadd.f32 0.0, %v371
  %373 = vdwg.mxu0
  %374 = vmatpush.msra.mxu0 %v300
  %375 = vmatpush.msra.mxu0 %v294
  %376 = vmatpush.msra.mxu0 %v288
  %377 = vmatpush.msra.mxu0 %v282
  %378 = vmatpush.msra.mxu0 %v276
  %379 = vmatpush.msra.mxu0 %v270
  %380 = vmatpush.msra.mxu0 %v264
  %381 = vmatpush.msra.mxu0 %v258
  %382 = vmatpush.msra.mxu0 %v252
  %383 = vmatpush.msra.mxu0 %v246
  %384 = vmatpush.msra.mxu0 %v240
  %385 = vmatpush.msra.mxu0 %v234
  %386 = vmatpush.msra.mxu0 %v228
  %387 = vmatpush.msra.mxu0 %v222
  %388 = vmatpush.msra.mxu0 %v216
  %389 = vmatpush.msra.mxu0 %v210
  %390 = vmatmul.f32.gmra.mxu0 %v110
  %v391 = vpop.f32.mrf.mxu0
  %v392 = vadd.f32 %v369, %v391
  %393 = vmatmul.f32.gmra.mxu0 %v112
  %v394 = vpop.f32.mrf.mxu0
  %v395 = vadd.f32 %v372, %v394
  %396 = vdwg.mxu0
  %397 = vmatpush.msra.mxu0 %v205
  %398 = vmatpush.msra.mxu0 %v199
  %399 = vmatpush.msra.mxu0 %v193
  %400 = vmatpush.msra.mxu0 %v187
  %401 = vmatpush.msra.mxu0 %v181
  %402 = vmatpush.msra.mxu0 %v175
  %403 = vmatpush.msra.mxu0 %v169
  %404 = vmatpush.msra.mxu0 %v163
  %405 = vmatpush.msra.mxu0 %v157
  %406 = vmatpush.msra.mxu0 %v151
  %407 = vmatpush.msra.mxu0 %v145
  %408 = vmatpush.msra.mxu0 %v139
  %409 = vmatpush.msra.mxu0 %v133
  %410 = vmatpush.msra.mxu0 %v127
  %411 = vmatpush.msra.mxu0 %v121
  %412 = vmatpush.msra.mxu0 %v115
  %413 = vmatmul.f32.gmra.mxu0 %v109
  %v414 = vpop.f32.mrf.mxu0
  %v415 = vadd.f32 0.0, %v414
  %416 = vmatmul.f32.gmra.mxu0 %v111
  %v417 = vpop.f32.mrf.mxu0
  %v418 = vadd.f32 0.0, %v417
  %419 = vdwg.mxu0
  %420 = vmatpush.msra.mxu0 %v301
  %421 = vmatpush.msra.mxu0 %v295
  %422 = vmatpush.msra.mxu0 %v289
  %423 = vmatpush.msra.mxu0 %v283
  %424 = vmatpush.msra.mxu0 %v277
  %425 = vmatpush.msra.mxu0 %v271
  %426 = vmatpush.msra.mxu0 %v265
  %427 = vmatpush.msra.mxu0 %v259
  %428 = vmatpush.msra.mxu0 %v253
  %429 = vmatpush.msra.mxu0 %v247
  %430 = vmatpush.msra.mxu0 %v241
  %431 = vmatpush.msra.mxu0 %v235
  %432 = vmatpush.msra.mxu0 %v229
  %433 = vmatpush.msra.mxu0 %v223
  %434 = vmatpush.msra.mxu0 %v217
  %435 = vmatpush.msra.mxu0 %v211
  %436 = vmatmul.f32.gmra.mxu0 %v110
  %v437 = vpop.f32.mrf.mxu0
  %v438 = vadd.f32 %v415, %v437
  %439 = vmatmul.f32.gmra.mxu0 %v112
  %v440 = vpop.f32.mrf.mxu0
  %v441 = vadd.f32 %v418, %v440
  %442 = vdwg.mxu0
  %443 = vmatpush.msra.mxu0 %v206
  %444 = vmatpush.msra.mxu0 %v200
  %445 = vmatpush.msra.mxu0 %v194
  %446 = vmatpush.msra.mxu0 %v188
  %447 = vmatpush.msra.mxu0 %v182
  %448 = vmatpush.msra.mxu0 %v176
  %449 = vmatpush.msra.mxu0 %v170
  %450 = vmatpush.msra.mxu0 %v164
  %451 = vmatpush.msra.mxu0 %v158
  %452 = vmatpush.msra.mxu0 %v152
  %453 = vmatpush.msra.mxu0 %v146
  %454 = vmatpush.msra.mxu0 %v140
  %455 = vmatpush.msra.mxu0 %v134
  %456 = vmatpush.msra.mxu0 %v128
  %457 = vmatpush.msra.mxu0 %v122
  %458 = vmatpush.msra.mxu0 %v116
  %459 = vmatmul.f32.gmra.mxu0 %v109
  %v460 = vpop.f32.mrf.mxu0
  %v461 = vadd.f32 0.0, %v460
  %462 = vmatmul.f32.gmra.mxu0 %v111
  %v463 = vpop.f32.mrf.mxu0
  %v464 = vadd.f32 0.0, %v463
  %465 = vdwg.mxu0
  %466 = vmatpush.msra.mxu0 %v302
  %467 = vmatpush.msra.mxu0 %v296
  %468 = vmatpush.msra.mxu0 %v290
  %469 = vmatpush.msra.mxu0 %v284
  %470 = vmatpush.msra.mxu0 %v278
  %471 = vmatpush.msra.mxu0 %v272
  %472 = vmatpush.msra.mxu0 %v266
  %473 = vmatpush.msra.mxu0 %v260
  %474 = vmatpush.msra.mxu0 %v254
  %475 = vmatpush.msra.mxu0 %v248
  %476 = vmatpush.msra.mxu0 %v242
  %477 = vmatpush.msra.mxu0 %v236
  %478 = vmatpush.msra.mxu0 %v230
  %479 = vmatpush.msra.mxu0 %v224
  %480 = vmatpush.msra.mxu0 %v218
  %481 = vmatpush.msra.mxu0 %v212
  %482 = vmatmul.f32.gmra.mxu0 %v110
  %v483 = vpop.f32.mrf.mxu0
  %v484 = vadd.f32 %v461, %v483
  %485 = vmatmul.f32.gmra.mxu0 %v112
  %v486 = vpop.f32.mrf.mxu0
  %v487 = vadd.f32 %v464, %v486
  %488 = vdwg.mxu0
  %489 = vmatpush.msra.mxu0 %v207
  %490 = vmatpush.msra.mxu0 %v201
  %491 = vmatpush.msra.mxu0 %v195
  %492 = vmatpush.msra.mxu0 %v189
  %493 = vmatpush.msra.mxu0 %v183
  %494 = vmatpush.msra.mxu0 %v177
  %495 = vmatpush.msra.mxu0 %v171
  %496 = vmatpush.msra.mxu0 %v165
  %497 = vmatpush.msra.mxu0 %v159
  %498 = vmatpush.msra.mxu0 %v153
  %499 = vmatpush.msra.mxu0 %v147
  %500 = vmatpush.msra.mxu0 %v141
  %501 = vmatpush.msra.mxu0 %v135
  %502 = vmatpush.msra.mxu0 %v129
  %503 = vmatpush.msra.mxu0 %v123
  %504 = vmatpush.msra.mxu0 %v117
  %505 = vmatmul.f32.gmra.mxu0 %v109
  %v506 = vpop.f32.mrf.mxu0
  %v507 = vadd.f32 0.0, %v506
  %508 = vmatmul.f32.gmra.mxu0 %v111
  %v509 = vpop.f32.mrf.mxu0
  %v510 = vadd.f32 0.0, %v509
  %511 = vdwg.mxu0
  %512 = vmatpush.msra.mxu0 %v303
  %513 = vmatpush.msra.mxu0 %v297
  %514 = vmatpush.msra.mxu0 %v291
  %515 = vmatpush.msra.mxu0 %v285
  %516 = vmatpush.msra.mxu0 %v279
  %517 = vmatpush.msra.mxu0 %v273
  %518 = vmatpush.msra.mxu0 %v267
  %519 = vmatpush.msra.mxu0 %v261
  %520 = vmatpush.msra.mxu0 %v255
  %521 = vmatpush.msra.mxu0 %v249
  %522 = vmatpush.msra.mxu0 %v243
  %523 = vmatpush.msra.mxu0 %v237
  %524 = vmatpush.msra.mxu0 %v231
  %525 = vmatpush.msra.mxu0 %v225
  %526 = vmatpush.msra.mxu0 %v219
  %527 = vmatpush.msra.mxu0 %v213
  %528 = vmatmul.f32.gmra.mxu0 %v110
  %v529 = vpop.f32.mrf.mxu0
  %v530 = vadd.f32 %v507, %v529
  %531 = vmatmul.f32.gmra.mxu0 %v112
  %v532 = vpop.f32.mrf.mxu0
  %v533 = vadd.f32 %v510, %v532
  %534 = vdwg.mxu0
  %535 = vmatpush.msra.mxu0 %v208
  %536 = vmatpush.msra.mxu0 %v202
  %537 = vmatpush.msra.mxu0 %v196
  %538 = vmatpush.msra.mxu0 %v190
  %539 = vmatpush.msra.mxu0 %v184
  %540 = vmatpush.msra.mxu0 %v178
  %541 = vmatpush.msra.mxu0 %v172
  %542 = vmatpush.msra.mxu0 %v166
  %543 = vmatpush.msra.mxu0 %v160
  %544 = vmatpush.msra.mxu0 %v154
  %545 = vmatpush.msra.mxu0 %v148
  %546 = vmatpush.msra.mxu0 %v142
  %547 = vmatpush.msra.mxu0 %v136
  %548 = vmatpush.msra.mxu0 %v130
  %549 = vmatpush.msra.mxu0 %v124
  %550 = vmatpush.msra.mxu0 %v118
  %551 = vmatmul.f32.gmra.mxu0 %v109
  %v552 = vpop.f32.mrf.mxu0
  %v553 = vadd.f32 0.0, %v552
  %554 = vmatmul.f32.gmra.mxu0 %v111
  %v555 = vpop.f32.mrf.mxu0
  %v556 = vadd.f32 0.0, %v555
  %557 = vdwg.mxu0
  %558 = vmatpush.msra.mxu0 %v304
  %559 = vmatpush.msra.mxu0 %v298
  %560 = vmatpush.msra.mxu0 %v292
  %561 = vmatpush.msra.mxu0 %v286
  %562 = vmatpush.msra.mxu0 %v280
  %563 = vmatpush.msra.mxu0 %v274
  %564 = vmatpush.msra.mxu0 %v268
  %565 = vmatpush.msra.mxu0 %v262
  %566 = vmatpush.msra.mxu0 %v256
  %567 = vmatpush.msra.mxu0 %v250
  %568 = vmatpush.msra.mxu0 %v244
  %569 = vmatpush.msra.mxu0 %v238
  %570 = vmatpush.msra.mxu0 %v232
  %571 = vmatpush.msra.mxu0 %v226
  %572 = vmatpush.msra.mxu0 %v220
  %573 = vmatpush.msra.mxu0 %v214
  %574 = vmatmul.f32.gmra.mxu0 %v110
  %v575 = vpop.f32.mrf.mxu0
  %v576 = vadd.f32 %v553, %v575
  %577 = vmatmul.f32.gmra.mxu0 %v112
  %v578 = vpop.f32.mrf.mxu0
  %v579 = vadd.f32 %v556, %v578
  %580 = vdwg.mxu0
  %581 = vmatpush.xpose.msra.mxu0 0.0
  %582 = vmatpush.xpose.msra.mxu0 0.0
  %583 = vmatpush.xpose.msra.mxu0 0.0
  %584 = vmatpush.xpose.msra.mxu0 0.0
  %585 = vmatpush.xpose.msra.mxu0 0.0
  %586 = vmatpush.xpose.msra.mxu0 0.0
  %587 = vmatpush.xpose.msra.mxu0 0.0
  %588 = vmatpush.xpose.msra.mxu0 0.0
  %589 = vmatpush.xpose.msra.mxu0 0.0
  %590 = vmatpush.xpose.msra.mxu0 0.0
  %591 = vmatpush.xpose.msra.mxu0 0.0
  %592 = vmatpush.xpose.msra.mxu0 0.0
  %593 = vmatpush.xpose.msra.mxu0 0.0
  %594 = vmatpush.xpose.msra.mxu0 0.0
  %595 = vmatpush.xpose.msra.mxu0 0.0
  %596 = vmatpush.xpose.msra.mxu0 %v438
  %597 = vmatmul.f32.gmra.mxu0 %v346
  %v598 = vpop.f32.mrf.mxu0
  %v599 = vadd.f32 0.0, %v598
  %600 = vdwg.mxu0
  %601 = vmatpush.xpose.msra.mxu0 0.0
  %602 = vmatpush.xpose.msra.mxu0 0.0
  %603 = vmatpush.xpose.msra.mxu0 0.0
  %604 = vmatpush.xpose.msra.mxu0 0.0
  %605 = vmatpush.xpose.msra.mxu0 0.0
  %606 = vmatpush.xpose.msra.mxu0 0.0
  %607 = vmatpush.xpose.msra.mxu0 0.0
  %608 = vmatpush.xpose.msra.mxu0 0.0
  %609 = vmatpush.xpose.msra.mxu0 0.0
  %610 = vmatpush.xpose.msra.mxu0 0.0
  %611 = vmatpush.xpose.msra.mxu0 0.0
  %612 = vmatpush.xpose.msra.mxu0 0.0
  %613 = vmatpush.xpose.msra.mxu0 0.0
  %614 = vmatpush.xpose.msra.mxu0 0.0
  %615 = vmatpush.xpose.msra.mxu0 0.0
  %616 = vmatpush.xpose.msra.mxu0 %v441
  %617 = vmatmul.f32.gmra.mxu0 %v349
  %v618 = vpop.f32.mrf.mxu0
  %v619 = vadd.f32 0.0, %v618
  %620 = vdwg.mxu0
  %v621 = vmul.f32 %v599, 0.25
  %v622 = vmul.f32 %v619, 0.25
  %vm623 = vcmask 64512
  %v624 = vsel %vm623, %v621, -inf
  %625 = vmax.xlane.f32.xlu0 %v624
  %v626 = vpop.xlane.xlu0 %625
  %v627 = vsel %vm623, %v622, -inf
  %628 = vmax.xlane.f32.xlu0 %v627
  %v629 = vpop.xlane.xlu0 %628
  %v630 = vsub.f32 %v621, %v626
  %v631 = vsub.f32 %v622, %v629
  %v632 = vmul.f32 %v630, 1.442695
  %v633 = vpow.pop %v632
  %v634 = vmul.f32 %v631, 1.442695
  %v635 = vpow.pop %v634
  %v636 = vsel %vm623, %v633, 0.0
  %637 = vadd.xlane.f32.xlu0 %v636
  %v638 = vpop.xlane.xlu0 %637
  %v639 = vsel %vm623, %v635, 0.0
  %640 = vadd.xlane.f32.xlu0 %v639
  %v641 = vpop.xlane.xlu0 %640
  %v642 = vrcp.pop %v638
  %v643 = vmul.f32 %v638, %v642
  %v644 = vsub.f32 1.0, %v643
  %v645 = vmul.f32 %v642, %v644
  %v646 = vadd.f32 %v642, %v645
  %vm647 = vweird.f32 %v638
  %vm648 = vweird.f32 %v642
  %vm649 = vmor %vm647, %vm648
  %v650 = vsel %vm649, %v642, %v646
  %v651 = vand.u32 2147483647, %v638
  %vm652 = vcmp.eq.f32.partialorder %v651, 8.507059e+37
  %v653 = vand.u32 %v638, 2147483648
  %v654 = vor.u32 1.1754944e-38, %v653
  %v655 = vsel %vm652, %v654, %v650
  %v656 = vrcp.pop %v641
  %v657 = vmul.f32 %v641, %v656
  %v658 = vsub.f32 1.0, %v657
  %v659 = vmul.f32 %v656, %v658
  %v660 = vadd.f32 %v656, %v659
  %vm661 = vweird.f32 %v641
  %vm662 = vweird.f32 %v656
  %vm663 = vmor %vm661, %vm662
  %v664 = vsel %vm663, %v656, %v660
  %v665 = vand.u32 2147483647, %v641
  %vm666 = vcmp.eq.f32.partialorder %v665, 8.507059e+37
  %v667 = vand.u32 %v641, 2147483648
  %v668 = vor.u32 1.1754944e-38, %v667
  %v669 = vsel %vm666, %v668, %v664
  %v670 = vmul.f32 %v633, %v655
  %v671 = vmul.f32 %v635, %v669
  %v673 = vsel %vm623, %v670, 0
  %675 = vmatpush.msra.mxu0 0.0
  %676 = vmatpush.msra.mxu0 0.0
  %677 = vmatpush.msra.mxu0 0.0
  %678 = vmatpush.msra.mxu0 0.0
  %679 = vmatpush.msra.mxu0 0.0
  %680 = vmatpush.msra.mxu0 0.0
  %681 = vmatpush.msra.mxu0 0.0
  %682 = vmatpush.msra.mxu0 0.0
  %683 = vmatpush.msra.mxu0 0.0
  %684 = vmatpush.msra.mxu0 0.0
  %685 = vmatpush.msra.mxu0 0.0
  %686 = vmatpush.msra.mxu0 0.0
  %687 = vmatpush.msra.mxu0 0.0
  %688 = vmatpush.msra.mxu0 0.0
  %689 = vmatpush.msra.mxu0 0.0
  %690 = vmatpush.msra.mxu0 %v530
  %691 = vmatmul.f32.gmra.mxu0 %v673
  %v692 = vpop.f32.mrf.mxu0
  %v693 = vadd.f32 0.0, %v692
  %694 = vdwg.mxu0
  %v696 = vsel %vm623, %v671, 0
  %698 = vmatpush.msra.mxu0 0.0
  %699 = vmatpush.msra.mxu0 0.0
  %700 = vmatpush.msra.mxu0 0.0
  %701 = vmatpush.msra.mxu0 0.0
  %702 = vmatpush.msra.mxu0 0.0
  %703 = vmatpush.msra.mxu0 0.0
  %704 = vmatpush.msra.mxu0 0.0
  %705 = vmatpush.msra.mxu0 0.0
  %706 = vmatpush.msra.mxu0 0.0
  %707 = vmatpush.msra.mxu0 0.0
  %708 = vmatpush.msra.mxu0 0.0
  %709 = vmatpush.msra.mxu0 0.0
  %710 = vmatpush.msra.mxu0 0.0
  %711 = vmatpush.msra.mxu0 0.0
  %712 = vmatpush.msra.mxu0 0.0
  %713 = vmatpush.msra.mxu0 %v533
  %714 = vmatmul.f32.gmra.mxu0 %v696
  %v715 = vpop.f32.mrf.mxu0
  %v716 = vadd.f32 0.0, %v715
  %717 = vdwg.mxu0
  %718 = vmatpush.xpose.msra.mxu0 0.0
  %719 = vmatpush.xpose.msra.mxu0 0.0
  %720 = vmatpush.xpose.msra.mxu0 0.0
  %721 = vmatpush.xpose.msra.mxu0 0.0
  %722 = vmatpush.xpose.msra.mxu0 0.0
  %723 = vmatpush.xpose.msra.mxu0 0.0
  %724 = vmatpush.xpose.msra.mxu0 0.0
  %725 = vmatpush.xpose.msra.mxu0 0.0
  %726 = vmatpush.xpose.msra.mxu0 0.0
  %727 = vmatpush.xpose.msra.mxu0 0.0
  %728 = vmatpush.xpose.msra.mxu0 0.0
  %729 = vmatpush.xpose.msra.mxu0 0.0
  %730 = vmatpush.xpose.msra.mxu0 0.0
  %731 = vmatpush.xpose.msra.mxu0 0.0
  %732 = vmatpush.xpose.msra.mxu0 0.0
  %733 = vmatpush.xpose.msra.mxu0 %v484
  %734 = vmatmul.f32.gmra.mxu0 %v392
  %v735 = vpop.f32.mrf.mxu0
  %v736 = vadd.f32 0.0, %v735
  %737 = vdwg.mxu0
  %738 = vmatpush.xpose.msra.mxu0 0.0
  %739 = vmatpush.xpose.msra.mxu0 0.0
  %740 = vmatpush.xpose.msra.mxu0 0.0
  %741 = vmatpush.xpose.msra.mxu0 0.0
  %742 = vmatpush.xpose.msra.mxu0 0.0
  %743 = vmatpush.xpose.msra.mxu0 0.0
  %744 = vmatpush.xpose.msra.mxu0 0.0
  %745 = vmatpush.xpose.msra.mxu0 0.0
  %746 = vmatpush.xpose.msra.mxu0 0.0
  %747 = vmatpush.xpose.msra.mxu0 0.0
  %748 = vmatpush.xpose.msra.mxu0 0.0
  %749 = vmatpush.xpose.msra.mxu0 0.0
  %750 = vmatpush.xpose.msra.mxu0 0.0
  %751 = vmatpush.xpose.msra.mxu0 0.0
  %752 = vmatpush.xpose.msra.mxu0 0.0
  %753 = vmatpush.xpose.msra.mxu0 %v487
  %754 = vmatmul.f32.gmra.mxu0 %v395
  %v755 = vpop.f32.mrf.mxu0
  %v756 = vadd.f32 0.0, %v755
  %757 = vdwg.mxu0
  %v758 = vmul.f32 %v736, 0.25
  %v759 = vmul.f32 %v756, 0.25
  %v760 = vsel %vm623, %v758, -inf
  %761 = vmax.xlane.f32.xlu0 %v760
  %v762 = vpop.xlane.xlu0 %761
  %v763 = vsel %vm623, %v759, -inf
  %764 = vmax.xlane.f32.xlu0 %v763
  %v765 = vpop.xlane.xlu0 %764
  %v766 = vsub.f32 %v758, %v762
  %v767 = vsub.f32 %v759, %v765
  %v768 = vmul.f32 %v766, 1.442695
  %v769 = vpow.pop %v768
  %v770 = vmul.f32 %v767, 1.442695
  %v771 = vpow.pop %v770
  %v772 = vsel %vm623, %v769, 0.0
  %773 = vadd.xlane.f32.xlu0 %v772
  %v774 = vpop.xlane.xlu0 %773
  %v775 = vsel %vm623, %v771, 0.0
  %776 = vadd.xlane.f32.xlu0 %v775
  %v777 = vpop.xlane.xlu0 %776
  %v778 = vrcp.pop %v774
  %v779 = vmul.f32 %v774, %v778
  %v780 = vsub.f32 1.0, %v779
  %v781 = vmul.f32 %v778, %v780
  %v782 = vadd.f32 %v778, %v781
  %vm783 = vweird.f32 %v774
  %vm784 = vweird.f32 %v778
  %vm785 = vmor %vm783, %vm784
  %v786 = vsel %vm785, %v778, %v782
  %v787 = vand.u32 2147483647, %v774
  %vm788 = vcmp.eq.f32.partialorder %v787, 8.507059e+37
  %v789 = vand.u32 %v774, 2147483648
  %v790 = vor.u32 1.1754944e-38, %v789
  %v791 = vsel %vm788, %v790, %v786
  %v792 = vrcp.pop %v777
  %v793 = vmul.f32 %v777, %v792
  %v794 = vsub.f32 1.0, %v793
  %v795 = vmul.f32 %v792, %v794
  %v796 = vadd.f32 %v792, %v795
  %vm797 = vweird.f32 %v777
  %vm798 = vweird.f32 %v792
  %vm799 = vmor %vm797, %vm798
  %v800 = vsel %vm799, %v792, %v796
  %v801 = vand.u32 2147483647, %v777
  %vm802 = vcmp.eq.f32.partialorder %v801, 8.507059e+37
  %v803 = vand.u32 %v777, 2147483648
  %v804 = vor.u32 1.1754944e-38, %v803
  %v805 = vsel %vm802, %v804, %v800
  %v806 = vmul.f32 %v769, %v791
  %v807 = vmul.f32 %v771, %v805
  %v809 = vsel %vm623, %v806, 0
  %811 = vmatpush.msra.mxu0 0.0
  %812 = vmatpush.msra.mxu0 0.0
  %813 = vmatpush.msra.mxu0 0.0
  %814 = vmatpush.msra.mxu0 0.0
  %815 = vmatpush.msra.mxu0 0.0
  %816 = vmatpush.msra.mxu0 0.0
  %817 = vmatpush.msra.mxu0 0.0
  %818 = vmatpush.msra.mxu0 0.0
  %819 = vmatpush.msra.mxu0 0.0
  %820 = vmatpush.msra.mxu0 0.0
  %821 = vmatpush.msra.mxu0 0.0
  %822 = vmatpush.msra.mxu0 0.0
  %823 = vmatpush.msra.mxu0 0.0
  %824 = vmatpush.msra.mxu0 0.0
  %825 = vmatpush.msra.mxu0 0.0
  %826 = vmatpush.msra.mxu0 %v576
  %827 = vmatmul.f32.gmra.mxu0 %v809
  %v828 = vpop.f32.mrf.mxu0
  %v829 = vadd.f32 0.0, %v828
  %830 = vdwg.mxu0
  %v832 = vsel %vm623, %v807, 0
  %834 = vmatpush.msra.mxu0 0.0
  %835 = vmatpush.msra.mxu0 0.0
  %836 = vmatpush.msra.mxu0 0.0
  %837 = vmatpush.msra.mxu0 0.0
  %838 = vmatpush.msra.mxu0 0.0
  %839 = vmatpush.msra.mxu0 0.0
  %840 = vmatpush.msra.mxu0 0.0
  %841 = vmatpush.msra.mxu0 0.0
  %842 = vmatpush.msra.mxu0 0.0
  %843 = vmatpush.msra.mxu0 0.0
  %844 = vmatpush.msra.mxu0 0.0
  %845 = vmatpush.msra.mxu0 0.0
  %846 = vmatpush.msra.mxu0 0.0
  %847 = vmatpush.msra.mxu0 0.0
  %848 = vmatpush.msra.mxu0 0.0
  %849 = vmatpush.msra.mxu0 %v579
  %850 = vmatmul.f32.gmra.mxu0 %v832
  %v851 = vpop.f32.mrf.mxu0
  %v852 = vadd.f32 0.0, %v851
  %853 = vdwg.mxu0
  %v854 = vld [vmem:[%s2] sm:$0xff]
  %v855 = vld [vmem:[%s2 + $0x8] sm:$0xff]
  %v856 = vld [vmem:[%s2 + $0x10] sm:$0xff]
  %v857 = vld [vmem:[%s2 + $0x18] sm:$0xff]
  %v858 = vld [vmem:[%s2 + $0x20] sm:$0xff]
  %v859 = vld [vmem:[%s2 + $0x28] sm:$0xff]
  %v860 = vld [vmem:[%s2 + $0x30] sm:$0xff]
  %v861 = vld [vmem:[%s2 + $0x38] sm:$0xff]
  %v862 = vld [vmem:[%s2 + $0x40] sm:$0xff]
  %v863 = vld [vmem:[%s2 + $0x48] sm:$0xff]
  %v864 = vld [vmem:[%s2 + $0x50] sm:$0xff]
  %v865 = vld [vmem:[%s2 + $0x58] sm:$0xff]
  %v866 = vld [vmem:[%s2 + $0x60] sm:$0xff]
  %v867 = vld [vmem:[%s2 + $0x68] sm:$0xff]
  %v868 = vld [vmem:[%s2 + $0x70] sm:$0xff]
  %v869 = vld [vmem:[%s2 + $0x78] sm:$0xff]
  %v870 = vld [vmem:[%s2 + $0x80] sm:$0xff]
  %v871 = vld [vmem:[%s2 + $0x88] sm:$0xff]
  %v872 = vld [vmem:[%s2 + $0x90] sm:$0xff]
  %v873 = vld [vmem:[%s2 + $0x98] sm:$0xff]
  %v874 = vld [vmem:[%s2 + $0xa0] sm:$0xff]
  %v875 = vld [vmem:[%s2 + $0xa8] sm:$0xff]
  %v876 = vld [vmem:[%s2 + $0xb0] sm:$0xff]
  %v877 = vld [vmem:[%s2 + $0xb8] sm:$0xff]
  %v878 = vld [vmem:[%s2 + $0xc0] sm:$0xff]
  %v879 = vld [vmem:[%s2 + $0xc8] sm:$0xff]
  %v880 = vld [vmem:[%s2 + $0xd0] sm:$0xff]
  %v881 = vld [vmem:[%s2 + $0xd8] sm:$0xff]
  %v882 = vld [vmem:[%s2 + $0xe0] sm:$0xff]
  %v883 = vld [vmem:[%s2 + $0xe8] sm:$0xff]
  %v884 = vld [vmem:[%s2 + $0xf0] sm:$0xff]
  %v885 = vld [vmem:[%s2 + $0xf8] sm:$0xff]
  %v886 = vld [vmem:[%s2 + $0x100] sm:$0xff]
  %v887 = vld [vmem:[%s2 + $0x108] sm:$0xff]
  %v888 = vld [vmem:[%s2 + $0x110] sm:$0xff]
  %v889 = vld [vmem:[%s2 + $0x118] sm:$0xff]
  %v890 = vld [vmem:[%s2 + $0x120] sm:$0xff]
  %v891 = vld [vmem:[%s2 + $0x128] sm:$0xff]
  %v892 = vld [vmem:[%s2 + $0x130] sm:$0xff]
  %v893 = vld [vmem:[%s2 + $0x138] sm:$0xff]
  %v894 = vld [vmem:[%s2 + $0x140] sm:$0xff]
  %v895 = vld [vmem:[%s2 + $0x148] sm:$0xff]
  %v896 = vld [vmem:[%s2 + $0x150] sm:$0xff]
  %v897 = vld [vmem:[%s2 + $0x158] sm:$0xff]
  %v898 = vld [vmem:[%s2 + $0x160] sm:$0xff]
  %v899 = vld [vmem:[%s2 + $0x168] sm:$0xff]
  %v900 = vld [vmem:[%s2 + $0x170] sm:$0xff]
  %v901 = vld [vmem:[%s2 + $0x178] sm:$0xff]
  %v902 = vld [vmem:[%s2 + $0x180] sm:$0xff]
  %v903 = vld [vmem:[%s2 + $0x188] sm:$0xff]
  %v904 = vld [vmem:[%s2 + $0x190] sm:$0xff]
  %v905 = vld [vmem:[%s2 + $0x198] sm:$0xff]
  %v906 = vld [vmem:[%s2 + $0x1a0] sm:$0xff]
  %v907 = vld [vmem:[%s2 + $0x1a8] sm:$0xff]
  %v908 = vld [vmem:[%s2 + $0x1b0] sm:$0xff]
  %v909 = vld [vmem:[%s2 + $0x1b8] sm:$0xff]
  %v910 = vld [vmem:[%s2 + $0x1c0] sm:$0xff]
  %v911 = vld [vmem:[%s2 + $0x1c8] sm:$0xff]
  %v912 = vld [vmem:[%s2 + $0x1d0] sm:$0xff]
  %v913 = vld [vmem:[%s2 + $0x1d8] sm:$0xff]
  %v914 = vld [vmem:[%s2 + $0x1e0] sm:$0xff]
  %v915 = vld [vmem:[%s2 + $0x1e8] sm:$0xff]
  %v916 = vld [vmem:[%s2 + $0x1f0] sm:$0xff]
  %v917 = vld [vmem:[%s2 + $0x1f8] sm:$0xff]
  %v918 = vld [vmem:[%s3] sm:$0x3]
  %v920 = vperm.slane %v918, 0
  %v921 = vperm.slane %v918, 1
  %924 = vmatpush.msra.mxu0 %v884
  %925 = vmatpush.msra.mxu0 %v882
  %926 = vmatpush.msra.mxu0 %v880
  %927 = vmatpush.msra.mxu0 %v878
  %928 = vmatpush.msra.mxu0 %v876
  %929 = vmatpush.msra.mxu0 %v874
  %930 = vmatpush.msra.mxu0 %v872
  %931 = vmatpush.msra.mxu0 %v870
  %932 = vmatpush.msra.mxu0 %v868
  %933 = vmatpush.msra.mxu0 %v866
  %934 = vmatpush.msra.mxu0 %v864
  %935 = vmatpush.msra.mxu0 %v862
  %936 = vmatpush.msra.mxu0 %v860
  %937 = vmatpush.msra.mxu0 %v858
  %938 = vmatpush.msra.mxu0 %v856
  %939 = vmatpush.msra.mxu0 %v854
  %940 = vmatmul.f32.gmra.mxu0 %v693
  %v941 = vpop.f32.mrf.mxu0
  %v942 = vadd.f32 %v920, %v941
  %943 = vmatmul.f32.gmra.mxu0 %v716
  %v944 = vpop.f32.mrf.mxu0
  %v945 = vadd.f32 %v920, %v944
  %946 = vdwg.mxu0
  %947 = vmatpush.msra.mxu0 %v916
  %948 = vmatpush.msra.mxu0 %v914
  %949 = vmatpush.msra.mxu0 %v912
  %950 = vmatpush.msra.mxu0 %v910
  %951 = vmatpush.msra.mxu0 %v908
  %952 = vmatpush.msra.mxu0 %v906
  %953 = vmatpush.msra.mxu0 %v904
  %954 = vmatpush.msra.mxu0 %v902
  %955 = vmatpush.msra.mxu0 %v900
  %956 = vmatpush.msra.mxu0 %v898
  %957 = vmatpush.msra.mxu0 %v896
  %958 = vmatpush.msra.mxu0 %v894
  %959 = vmatpush.msra.mxu0 %v892
  %960 = vmatpush.msra.mxu0 %v890
  %961 = vmatpush.msra.mxu0 %v888
  %962 = vmatpush.msra.mxu0 %v886
  %963 = vmatmul.f32.gmra.mxu0 %v829
  %v964 = vpop.f32.mrf.mxu0
  %v965 = vadd.f32 %v942, %v964
  %966 = vmatmul.f32.gmra.mxu0 %v852
  %v967 = vpop.f32.mrf.mxu0
  %v968 = vadd.f32 %v945, %v967
  %969 = vdwg.mxu0
  %970 = vmatpush.msra.mxu0 %v885
  %971 = vmatpush.msra.mxu0 %v883
  %972 = vmatpush.msra.mxu0 %v881
  %973 = vmatpush.msra.mxu0 %v879
  %974 = vmatpush.msra.mxu0 %v877
  %975 = vmatpush.msra.mxu0 %v875
  %976 = vmatpush.msra.mxu0 %v873
  %977 = vmatpush.msra.mxu0 %v871
  %978 = vmatpush.msra.mxu0 %v869
  %979 = vmatpush.msra.mxu0 %v867
  %980 = vmatpush.msra.mxu0 %v865
  %981 = vmatpush.msra.mxu0 %v863
  %982 = vmatpush.msra.mxu0 %v861
  %983 = vmatpush.msra.mxu0 %v859
  %984 = vmatpush.msra.mxu0 %v857
  %985 = vmatpush.msra.mxu0 %v855
  %986 = vmatmul.f32.gmra.mxu0 %v693
  %v987 = vpop.f32.mrf.mxu0
  %v988 = vadd.f32 %v921, %v987
  %989 = vmatmul.f32.gmra.mxu0 %v716
  %v990 = vpop.f32.mrf.mxu0
  %v991 = vadd.f32 %v921, %v990
  %992 = vdwg.mxu0
  %993 = vmatpush.msra.mxu0 %v917
  %994 = vmatpush.msra.mxu0 %v915
  %995 = vmatpush.msra.mxu0 %v913
  %996 = vmatpush.msra.mxu0 %v911
  %997 = vmatpush.msra.mxu0 %v909
  %998 = vmatpush.msra.mxu0 %v907
  %999 = vmatpush.msra.mxu0 %v905
  %1000 = vmatpush.msra.mxu0 %v903
  %1001 = vmatpush.msra.mxu0 %v901
  %1002 = vmatpush.msra.mxu0 %v899
  %1003 = vmatpush.msra.mxu0 %v897
  %1004 = vmatpush.msra.mxu0 %v895
  %1005 = vmatpush.msra.mxu0 %v893
  %1006 = vmatpush.msra.mxu0 %v891
  %1007 = vmatpush.msra.mxu0 %v889
  %1008 = vmatpush.msra.mxu0 %v887
  %1009 = vmatmul.f32.gmra.mxu0 %v829
  %v1010 = vpop.f32.mrf.mxu0
  %v1011 = vadd.f32 %v988, %v1010
  %1012 = vmatmul.f32.gmra.mxu0 %v852
  %v1013 = vpop.f32.mrf.mxu0
  %v1014 = vadd.f32 %v991, %v1013
  %1015 = vdwg.mxu0
  %v1016 = vadd.f32 %v965, %v23
  %v1017 = vadd.f32 %v1011, %v24
  %v1018 = vadd.f32 %v968, %v25
  %v1019 = vadd.f32 %v1014, %v26
  %1020 = vst [vmem:[%s6] sm:$0xff] %v1016
  %1021 = vst [vmem:[%s6 + $0x8] sm:$0xff] %v1017
  %1022 = vst [vmem:[%s6 + $0x10] sm:$0xff] %v1018
  %1023 = vst [vmem:[%s6 + $0x18] sm:$0xff] %v1019
  // Predicated region
  $region26: #{self_attention_forward.1} parent=0 // pred_check
    _
  $region27: #{self_attention_forward.1} parent=0 // pred_check_branch
    %1025 = sbr.rel (0) target = $region29
  $region28: #{self_attention_forward.1} parent=0 // pred_region
    _
  $region29: #{self_attention_forward.1} parent=0 // pred_fallthru
    _
  // Predicated region
  $region30: #{self_attention_forward.1} parent=0 // pred_check
    _
  $region31: #{self_attention_forward.1} parent=0 // pred_check_branch
    %1027 = sbr.rel (0) target = $region33
  $region32: #{self_attention_forward.1} parent=0 // pred_region
    _
  $region33: #{self_attention_forward.1} parent=0 // pred_fallthru
    _

</llo_original>
